<compile_context>
chip_gen: v7x
topology: tpu7x:2x2x1
jax: 0.10.0
libtpu: 0.0.40
codegen_flags: <defaults>
</compile_context>

<pallas_src>
import numpy as np
import jax
import jax.numpy as jnp
from jax.experimental import pallas as pl
from jax.experimental.pallas import tpu as pltpu

TWO_PI = 2.0 * np.pi
NB = 12   # number of basis rows / coefficient columns


def _round_up(x, m):
    return ((x + m - 1) // m) * m


# --------------------------------------------------------------------------
# Pallas kernel: pure GEMM  [TN, NB] @ [NB, TT] -> lane-dense [TN, TT] tile
# --------------------------------------------------------------------------
def _insar_kernel(c_ref, b_ref, out_ref):
    out_ref[...] = jnp.dot(c_ref[...], b_ref[...],
                           preferred_element_type=jnp.float32,
                           precision=jax.lax.Precision.HIGHEST)


# --------------------------------------------------------------------------
# Plain-JAX glue: per-station coefficient matrix C [N, 12]
# (adaptive sigmoid mixing + neighbor gather + circular phase smoothing)
# --------------------------------------------------------------------------
def build_coefficients(params, nbr_idx, nbr_w):
    f32 = jnp.float32
    offset = params["constant_offset"].astype(f32)       # [N]
    trend = params["linear_trend"].astype(f32)            # [N]
    spw = params["spatial_weights"].astype(f32)            # [N]
    samp = params["seasonal_amplitudes"].astype(f32)        # [N, 3]
    sph = params["seasonal_phases"].astype(f32)              # [N, 3]
    lamp = params["longterm_amplitudes"].astype(f32)          # [N, 2]
    lph = params["longterm_phases"].astype(f32)                # [N, 2]
    w = nbr_w.astype(f32)                                       # [N, K]

    mix = jax.nn.sigmoid(spw)[:, None]                          # [N, 1]

    # data-dependent neighbor gather + O(N*K) weighted reductions
    samp_nbr = samp[nbr_idx]                                    # [N, K, 3]
    sph_nbr = sph[nbr_idx]                                      # [N, K, 3]
    wavg_amp = jnp.einsum("nk,nkc->nc", w, samp_nbr)            # [N, 3]
    nbr_re = jnp.einsum("nk,nkc->nc", w, jnp.cos(sph_nbr))      # [N, 3]
    nbr_im = jnp.einsum("nk,nkc->nc", w, jnp.sin(sph_nbr))      # [N, 3]

    # adaptive amplitude smoothing
    sm_amp = (1.0 - mix) * samp + mix * wavg_amp                # [N, 3]
    # circular (complex) phase smoothing, exactly like torch.angle in the spec
    mre = (1.0 - mix) * jnp.cos(sph) + mix * nbr_re
    mim = (1.0 - mix) * jnp.sin(sph) + mix * nbr_im
    sm_ph = jnp.arctan2(mim, mre)                               # [N, 3]

    # amp*sin(w t + phi) = amp*cos(phi)*sin(w t) + amp*sin(phi)*cos(w t)
    coef = jnp.concatenate([
        offset[:, None], trend[:, None],
        sm_amp * jnp.cos(sm_ph), sm_amp * jnp.sin(sm_ph),
        lamp * jnp.cos(lph), lamp * jnp.sin(lph)], axis=1)      # [N, 12]
    return coef


def build_time_basis(time_vector, params, T_total):
    f32 = jnp.float32
    T = time_vector.shape[0]
    t_pad = jnp.pad(time_vector.astype(f32), (0, T_total - T))  # [T_total]
    omega_s = TWO_PI / params["periods"].astype(f32)             # [3]
    omega_l = TWO_PI / params["longterm_periods"].astype(f32)    # [2]
    arg_s = omega_s[:, None] * t_pad[None, :]                    # [3, T_total]
    arg_l = omega_l[:, None] * t_pad[None, :]                    # [2, T_total]
    return jnp.concatenate([jnp.ones((1, T_total), f32), t_pad[None, :],
                            jnp.sin(arg_s), jnp.cos(arg_s),
                            jnp.sin(arg_l), jnp.cos(arg_l)], axis=0)  # [NB, T_total]


# --------------------------------------------------------------------------
# Wrapper: minimal padding, cdiv grids, both axes parallel
# --------------------------------------------------------------------------
def phase2_forward_pallas(time_vector, params, nbr_idx, nbr_w,
                          station_block=256, time_block=2048):
    f32 = jnp.float32
    N = params["constant_offset"].shape[0]
    T = time_vector.shape[0]

    coef = build_coefficients(params, nbr_idx, nbr_w)            # [N, 12]

    # station tiling: pad output only to a multiple of 8 sublanes
    sb = max(8, (station_block // 8) * 8)
    N_pad = _round_up(N, 8)
    TN = N_pad if N_pad <= sb else sb
    grid_n = pl.cdiv(N_pad, TN)

    # time tiling: pad output only to a multiple of 128 lanes
    tb = max(128, (time_block // 128) * 128)
    T_pad = _round_up(T, 128)
    TT = T_pad if T_pad <= tb else tb
    grid_t = pl.cdiv(T_pad, TT)

    # Inputs (tiny) padded to whole blocks so reads stay in-bounds; output
    # stays at (N_pad, T_pad) and Pallas masks edge-block stores.
    N_in = grid_n * TN
    T_in = grid_t * TT
    if N_in != N:
        coef = jnp.pad(coef, ((0, N_in - N), (0, 0)))
    basis = build_time_basis(time_vector, params, T_in)          # [NB, T_in]

    out = pl.pallas_call(
        _insar_kernel,
        out_shape=jax.ShapeDtypeStruct((N_pad, T_pad), f32),
        grid_spec=pltpu.PrefetchScalarGridSpec(
            num_scalar_prefetch=0,
            grid=(grid_n, grid_t),
            in_specs=[
                pl.BlockSpec((TN, NB), lambda i, j: (i, 0)),     # coefficients
                pl.BlockSpec((NB, TT), lambda i, j: (0, j)),     # time basis
            ],
            out_specs=pl.BlockSpec((TN, TT), lambda i, j: (i, j)),
        ),
        compiler_params=pltpu.CompilerParams(
            dimension_semantics=("parallel", "parallel")),
    )(coef, basis)

    if N_pad == N and T_pad == T:
        return out
    return out[:N, :T]


# --------------------------------------------------------------------------
# Pure-JAX reference (mirrors the PyTorch forward, incl. atan2 phase angle)
# --------------------------------------------------------------------------
def phase2_forward_reference(time_vector, params, nbr_idx, nbr_w):
    t = time_vector[None, :]
    sig = params["constant_offset"][:, None] + params["linear_trend"][:, None] * t
    mix = jax.nn.sigmoid(params["spatial_weights"])
    periods = params["periods"]
    for i in range(3):
        amp = params["seasonal_amplitudes"][:, i]
        ph = params["seasonal_phases"][:, i]
        wavg_amp = jnp.sum(amp[nbr_idx] * nbr_w, axis=1)
        sm_amp = (1.0 - mix) * amp + mix * wavg_amp
        cre, cim = jnp.cos(ph), jnp.sin(ph)
        nre = jnp.sum(jnp.cos(ph[nbr_idx]) * nbr_w, axis=1)
        nim = jnp.sum(jnp.sin(ph[nbr_idx]) * nbr_w, axis=1)
        mre = (1.0 - mix) * cre + mix * nre
        mim = (1.0 - mix) * cim + mix * nim
        sm_ph = jnp.arctan2(mim, mre)
        freq = 1.0 / periods[i]
        sig = sig + sm_amp[:, None] * jnp.sin(TWO_PI * freq * t + sm_ph[:, None])
    for j in range(2):
        amp = params["longterm_amplitudes"][:, j]
        ph = params["longterm_phases"][:, j]
        freq = 1.0 / params["longterm_periods"][j]
        sig = sig + amp[:, None] * jnp.sin(TWO_PI * freq * t + ph[:, None])
    return sig


# --------------------------------------------------------------------------
# Deterministic setup (synthetic parameters; no checkpoint loading)
# --------------------------------------------------------------------------
def build_neighbor_graph(coords, k):
    """k-NN graph equivalent to sklearn NearestNeighbors (brute-force)."""
    # TODO(synk): kd-tree k-NN construction has no Pallas equivalent; done on host.
    d = np.linalg.norm(coords[:, None, :] - coords[None, :, :], axis=-1)
    order = np.argsort(d, axis=1)
    idx = order[:, 1:k + 1]                                   # drop self
    nd = np.take_along_axis(d, idx, axis=1)
    w = np.exp(-nd / np.median(nd))
    w = w / (np.sum(w, axis=1, keepdims=True) + 1e-6)
    return idx.astype(np.int32), w.astype(np.float32)


if __name__ == "__main__":
    N_STATIONS = 32
    N_TIMEPOINTS = 64
    N_NEIGHBORS = 8

    key = jax.random.PRNGKey(0)
    k_coord, k_rate, k_sph, k_lph = jax.random.split(key, 4)

    coordinates = np.asarray(
        jax.random.uniform(k_coord, (N_STATIONS, 2), dtype=jnp.float32) * 100.0)
    nbr_idx_np, nbr_w_np = build_neighbor_graph(coordinates, N_NEIGHBORS)
    nbr_idx = jnp.asarray(nbr_idx_np)
    nbr_w = jnp.asarray(nbr_w_np)

    params = {
        "linear_trend": jax.random.normal(k_rate, (N_STATIONS,), jnp.float32) * 2.0,
        "constant_offset": jnp.zeros((N_STATIONS,), jnp.float32),
        "seasonal_amplitudes": jnp.ones((N_STATIONS, 3), jnp.float32) * 10.0,
        "seasonal_phases": jax.random.uniform(k_sph, (N_STATIONS, 3), jnp.float32) * TWO_PI,
        "periods": jnp.array([0.25, 0.5, 1.0], jnp.float32),
        "longterm_amplitudes": jnp.ones((N_STATIONS, 2), jnp.float32) * 5.0,
        "longterm_phases": jax.random.uniform(k_lph, (N_STATIONS, 2), jnp.float32) * TWO_PI,
        "longterm_periods": jnp.array([2.0, 3.5], jnp.float32),
        "spatial_weights": jnp.ones((N_STATIONS,), jnp.float32) * 0.15,
    }

    # time vector in years, e.g. 64 samples over ~2 years
    time_vector = jnp.linspace(0.0, 2.0, N_TIMEPOINTS, dtype=jnp.float32)

    out = phase2_forward_pallas(time_vector, params, nbr_idx, nbr_w)
    out = jax.block_until_ready(out)

    ref = jax.block_until_ready(
        phase2_forward_reference(time_vector, params, nbr_idx, nbr_w))

    np.testing.assert_allclose(np.asarray(out), np.asarray(ref),
                               rtol=5e-4, atol=5e-3)
    print("KERNEL_OK")
</pallas_src>

<mosaic_0001>
module attributes {stable_mosaic.version = 11 : i64} {
  func.func @_insar_kernel(%arg0: i32, %arg1: i32, %arg2: memref<32x12xf32, #tpu.memory_space<vmem>>, %arg3: memref<12x128xf32, #tpu.memory_space<vmem>>, %arg4: memref<32x128xf32, #tpu.memory_space<vmem>>) attributes {dimension_semantics = [#tpu.dimension_semantics<parallel>, #tpu.dimension_semantics<parallel>], iteration_bounds = array<i64: 1, 1>, scalar_prefetch = 0 : i64, scratch_operands = 0 : i64, tpu.core_type = #tpu.core_type<tc>, window_params = [{transform_indices = @transform_0, window_bounds = array<i64: 32, 12>}, {transform_indices = @transform_1, window_bounds = array<i64: 12, 128>}, {transform_indices = @transform_2, window_bounds = array<i64: 32, 128>}]} {
    %c0 = arith.constant 0 : index
    %c0_0 = arith.constant 0 : index
    %0 = vector.load %arg2[%c0, %c0_0] : memref<32x12xf32, #tpu.memory_space<vmem>>, vector<32x12xf32>
    %c0_1 = arith.constant 0 : index
    %c0_2 = arith.constant 0 : index
    %1 = vector.load %arg3[%c0_1, %c0_2] : memref<12x128xf32, #tpu.memory_space<vmem>>, vector<12x128xf32>
    %cst = arith.constant dense<0.000000e+00> : vector<32x128xf32>
    %2 = tpu.matmul %0, %1, %cst {dimension_numbers = #tpu.dot_dimension_numbers<[1], [0], [0], [1], [0, 0, 1, 1], [], []>, precision = #tpu.contract_precision<fp32>} : vector<32x12xf32>, vector<12x128xf32>, vector<32x128xf32> -> vector<32x128xf32>
    %c0_3 = arith.constant 0 : index
    %c0_4 = arith.constant 0 : index
    %3 = vector.load %arg4[%c0_3, %c0_4] : memref<32x128xf32, #tpu.memory_space<vmem>>, vector<32x128xf32>
    tpu.vector_store %arg4[%c0_3, %c0_4], %2 {strides = array<i32>} : memref<32x128xf32, #tpu.memory_space<vmem>>, vector<32x128xf32>,
    return
  }
  func.func @transform_0(%arg0: i32, %arg1: i32) -> (i32, i32) {
    %c0_i32 = arith.constant 0 : i32
    %c0_i32_0 = arith.constant 0 : i32
    return %arg0, %c0_i32 : i32, i32
  }
  func.func @transform_1(%arg0: i32, %arg1: i32) -> (i32, i32) {
    %c0_i32 = arith.constant 0 : i32
    %c0_i32_0 = arith.constant 0 : i32
    return %c0_i32, %arg1 : i32, i32
  }
  func.func @transform_2(%arg0: i32, %arg1: i32) -> (i32, i32) {
    %c0_i32 = arith.constant 0 : i32
    return %arg0, %arg1 : i32, i32
  }
}

</mosaic_0001>

<llo_original>
// kernel: tpu_custom_call.1
$region0: #{tpu_custom_call.1}
  #allocation0 [shape = 'u32[]', space=smem, size = 0x4, offset = 0x4, fixed_abs, tag = 'smem constant byte address 0x4 - core index']
  #allocation1 [shape = 'u32[144,128]{1,0:T(1,128)}', space=vmem, size = 0x12000, scoped, tag = 'internal scratch']
  %s0 = inlined_call_operand.vmem [shape: f32[32,12], index: 0, kind: input, shape index: {}]
  %s1 = inlined_call_operand.vmem [shape: f32[12,128], index: 1, kind: input, shape index: {}]
  %s2 = inlined_call_operand.hbm [shape: f32[32,128], index: 2, kind: output, shape index: {}]
  %s3 = sld [smem:[#allocation0]]
  $region18: #{tpu_custom_call.1} parent=0
    _
  %s5 = ssub.s32 1, %s3
  %s6 = scalar_select 0, %s5, %s3
  $region1: #{tpu_custom_call.1} parent=0
    #allocation2 [shape = 'u8[16384]{0}', space=vmem, size = 0x4000, scoped, tag = 'output window, operand 0, single buffered']
    #allocation3 [shape = 's32[1]{0}', space=sflag, size = 0x4, scoped, tag = 'scoped memory for tpu_custom_call.1']
    %7 = vsyncpa [#allocation3], 0
    // Predicated region
    $region2: #{tpu_custom_call.1} parent=1 // pred_check
      _
    $region3: #{tpu_custom_call.1} parent=1 // pred_check_branch
      %9 = sbr.rel (0) target = $region5
    $region4: #{tpu_custom_call.1} parent=1 // pred_region
      _
    $region5: #{tpu_custom_call.1} parent=1 // pred_fallthru
      _
    // Predicated region
    $region6: #{tpu_custom_call.1} parent=1 // pred_check
      _
    $region7: #{tpu_custom_call.1} parent=1 // pred_check_branch
      %11 = sbr.rel (0) target = $region9
    $region8: #{tpu_custom_call.1} parent=1 // pred_region
      _
    $region9: #{tpu_custom_call.1} parent=1 // pred_fallthru
      _
    %v12 = vld [vmem:[%s0] sm:$0xff]
    %v13 = vld [vmem:[%s0 + $0x8] sm:$0xff]
    %v14 = vld [vmem:[%s0 + $0x10] sm:$0xff]
    %v15 = vld [vmem:[%s0 + $0x18] sm:$0xff]
    %v16 = vld [vmem:[%s1] sm:$0xff]
    %v17 = vld [vmem:[%s1 + $0x8] sm:$0xf]
    %vm18 = vcmask 97280
    %v20 = vsel %vm18, %v12, 0
    %v23 = vsel %vm18, %v13, 0
    %v26 = vsel %vm18, %v14, 0
    %v29 = vsel %vm18, %v15, 0
    %vm31 = vcmask 1043456
    %v33 = vsel %vm31, %v17, 0
    %35 = vmatprep.subr.mxu0 0.0
    %v36 = vand.u32 %v16, 4294901760
    %37 = vmatpush1.msra.mxu0 %v36
    %38 = vmatprep.subr.mxu0 0.0
    %v39 = vand.u32 %v33, 4294901760
    %40 = vmatpush1.msra.mxu0 %v39
    %41 = vmatprep.subr.mxu0 0.0
    %42 = vmatpush1.msra.mxu0 0.0
    %43 = vmatprep.subr.mxu0 0.0
    %44 = vmatpush1.msra.mxu0 0.0
    %45 = vmatprep.subr.mxu0 0.0
    %46 = vmatpush1.msra.mxu0 0.0
    %47 = vmatprep.subr.mxu0 0.0
    %48 = vmatpush1.msra.mxu0 0.0
    %49 = vmatprep.subr.mxu0 0.0
    %50 = vmatpush1.msra.mxu0 0.0
    %51 = vmatprep.subr.mxu0 0.0
    %52 = vmatpush1.msra.mxu0 0.0
    %53 = vmatprep.subr.mxu0 0.0
    %54 = vmatpush1.msra.mxu0 0.0
    %55 = vmatprep.subr.mxu0 0.0
    %56 = vmatpush1.msra.mxu0 0.0
    %57 = vmatprep.subr.mxu0 0.0
    %58 = vmatpush1.msra.mxu0 0.0
    %59 = vmatprep.subr.mxu0 0.0
    %60 = vmatpush1.msra.mxu0 0.0
    %61 = vmatprep.subr.mxu0 0.0
    %62 = vmatpush1.msra.mxu0 0.0
    %63 = vmatprep.subr.mxu0 0.0
    %64 = vmatpush1.msra.mxu0 0.0
    %65 = vmatprep.subr.mxu0 0.0
    %66 = vmatpush1.msra.mxu0 0.0
    %67 = vmatprep.subr.mxu0 0.0
    %68 = vmatpush1.msra.mxu0 0.0
    %69 = vmatprep.subr.mxu0 0.0
    %70 = vmatpush1.msra.mxu0 0.0
    %71 = vmatprep.subr.mxu0 0.0
    %72 = vmatpush1.msra.mxu0 0.0
    %73 = vmatprep.subr.mxu0 0.0
    %74 = vmatpush1.msra.mxu0 0.0
    %75 = vmatprep.subr.mxu0 0.0
    %76 = vmatpush1.msra.mxu0 0.0
    %77 = vmatprep.subr.mxu0 0.0
    %78 = vmatpush1.msra.mxu0 0.0
    %79 = vmatprep.subr.mxu0 0.0
    %80 = vmatpush1.msra.mxu0 0.0
    %81 = vmatprep.subr.mxu0 0.0
    %82 = vmatpush1.msra.mxu0 0.0
    %83 = vmatprep.subr.mxu0 0.0
    %84 = vmatpush1.msra.mxu0 0.0
    %85 = vmatprep.subr.mxu0 0.0
    %86 = vmatpush1.msra.mxu0 0.0
    %87 = vmatprep.subr.mxu0 0.0
    %88 = vmatpush1.msra.mxu0 0.0
    %89 = vmatprep.subr.mxu0 0.0
    %90 = vmatpush1.msra.mxu0 0.0
    %91 = vmatprep.subr.mxu0 0.0
    %92 = vmatpush1.msra.mxu0 0.0
    %93 = vmatprep.subr.mxu0 0.0
    %94 = vmatpush1.msra.mxu0 0.0
    %95 = vmatprep.subr.mxu0 0.0
    %96 = vmatpush1.msra.mxu0 0.0
    %97 = vmatprep.subr.mxu0 0.0
    %98 = vmatpush1.msra.mxu0 0.0
    %99 = vmatprep.subr.mxu0 0.0
    %100 = vmatpush1.msra.mxu0 0.0
    %101 = vmatprep.mubr.f32.mxu0 0.0
    %v102 = vand.u32 %v20, 4294901760
    %v103 = vsub.f32 %v20, %v102
    %v104 = vand.u32 %v103, 4294901760
    %v105 = vsub.f32 %v103, %v104
    %v106 = vand.u32 %v105, 4294901760
    %107 = vmatmul.mubr.f32.gmra.mrb[0].mxu0 %v106
    %v108 = vpop.f32.mrb[0].mxu0
    %v109 = vadd.f32 0.0, %v108
    %v110 = vpop.f32.mrb[0].mxu0
    %111 = vmatprep.mubr.f32.mxu0 0.0
    %v112 = vand.u32 %v23, 4294901760
    %v113 = vsub.f32 %v23, %v112
    %v114 = vand.u32 %v113, 4294901760
    %v115 = vsub.f32 %v113, %v114
    %v116 = vand.u32 %v115, 4294901760
    %117 = vmatmul.mubr.f32.gmra.mrb[0].mxu0 %v116
    %v118 = vpop.f32.mrb[0].mxu0
    %v119 = vadd.f32 0.0, %v118
    %v120 = vpop.f32.mrb[0].mxu0
    %121 = vmatprep.mubr.f32.mxu0 0.0
    %v122 = vand.u32 %v26, 4294901760
    %v123 = vsub.f32 %v26, %v122
    %v124 = vand.u32 %v123, 4294901760
    %v125 = vsub.f32 %v123, %v124
    %v126 = vand.u32 %v125, 4294901760
    %127 = vmatmul.mubr.f32.gmra.mrb[0].mxu0 %v126
    %v128 = vpop.f32.mrb[0].mxu0
    %v129 = vadd.f32 0.0, %v128
    %v130 = vpop.f32.mrb[0].mxu0
    %131 = vmatprep.mubr.f32.mxu0 0.0
    %v132 = vand.u32 %v29, 4294901760
    %v133 = vsub.f32 %v29, %v132
    %v134 = vand.u32 %v133, 4294901760
    %v135 = vsub.f32 %v133, %v134
    %v136 = vand.u32 %v135, 4294901760
    %137 = vmatmul.mubr.f32.gmra.mrb[0].mxu0 %v136
    %v138 = vpop.f32.mrb[0].mxu0
    %v139 = vadd.f32 0.0, %v138
    %v140 = vpop.f32.mrb[0].mxu0
    %141 = vdwg.mxu0
    %142 = vmatprep.subr.mxu0 0.0
    %v143 = vand.u32 %v16, 4294901760
    %v144 = vsub.f32 %v16, %v143
    %v145 = vand.u32 %v144, 4294901760
    %v146 = vsub.f32 %v144, %v145
    %v147 = vand.u32 %v146, 4294901760
    %148 = vmatpush1.msra.mxu0 %v147
    %149 = vmatprep.subr.mxu0 0.0
    %v150 = vand.u32 %v33, 4294901760
    %v151 = vsub.f32 %v33, %v150
    %v152 = vand.u32 %v151, 4294901760
    %v153 = vsub.f32 %v151, %v152
    %v154 = vand.u32 %v153, 4294901760
    %155 = vmatpush1.msra.mxu0 %v154
    %156 = vmatprep.subr.mxu0 0.0
    %157 = vmatpush1.msra.mxu0 0.0
    %158 = vmatprep.subr.mxu0 0.0
    %159 = vmatpush1.msra.mxu0 0.0
    %160 = vmatprep.subr.mxu0 0.0
    %161 = vmatpush1.msra.mxu0 0.0
    %162 = vmatprep.subr.mxu0 0.0
    %163 = vmatpush1.msra.mxu0 0.0
    %164 = vmatprep.subr.mxu0 0.0
    %165 = vmatpush1.msra.mxu0 0.0
    %166 = vmatprep.subr.mxu0 0.0
    %167 = vmatpush1.msra.mxu0 0.0
    %168 = vmatprep.subr.mxu0 0.0
    %169 = vmatpush1.msra.mxu0 0.0
    %170 = vmatprep.subr.mxu0 0.0
    %171 = vmatpush1.msra.mxu0 0.0
    %172 = vmatprep.subr.mxu0 0.0
    %173 = vmatpush1.msra.mxu0 0.0
    %174 = vmatprep.subr.mxu0 0.0
    %175 = vmatpush1.msra.mxu0 0.0
    %176 = vmatprep.subr.mxu0 0.0
    %177 = vmatpush1.msra.mxu0 0.0
    %178 = vmatprep.subr.mxu0 0.0
    %179 = vmatpush1.msra.mxu0 0.0
    %180 = vmatprep.subr.mxu0 0.0
    %181 = vmatpush1.msra.mxu0 0.0
    %182 = vmatprep.subr.mxu0 0.0
    %183 = vmatpush1.msra.mxu0 0.0
    %184 = vmatprep.subr.mxu0 0.0
    %185 = vmatpush1.msra.mxu0 0.0
    %186 = vmatprep.subr.mxu0 0.0
    %187 = vmatpush1.msra.mxu0 0.0
    %188 = vmatprep.subr.mxu0 0.0
    %189 = vmatpush1.msra.mxu0 0.0
    %190 = vmatprep.subr.mxu0 0.0
    %191 = vmatpush1.msra.mxu0 0.0
    %192 = vmatprep.subr.mxu0 0.0
    %193 = vmatpush1.msra.mxu0 0.0
    %194 = vmatprep.subr.mxu0 0.0
    %195 = vmatpush1.msra.mxu0 0.0
    %196 = vmatprep.subr.mxu0 0.0
    %197 = vmatpush1.msra.mxu0 0.0
    %198 = vmatprep.subr.mxu0 0.0
    %199 = vmatpush1.msra.mxu0 0.0
    %200 = vmatprep.subr.mxu0 0.0
    %201 = vmatpush1.msra.mxu0 0.0
    %202 = vmatprep.subr.mxu0 0.0
    %203 = vmatpush1.msra.mxu0 0.0
    %204 = vmatprep.subr.mxu0 0.0
    %205 = vmatpush1.msra.mxu0 0.0
    %206 = vmatprep.subr.mxu0 0.0
    %207 = vmatpush1.msra.mxu0 0.0
    %208 = vmatprep.subr.mxu0 0.0
    %209 = vmatpush1.msra.mxu0 0.0
    %210 = vmatprep.subr.mxu0 0.0
    %211 = vmatpush1.msra.mxu0 0.0
    %212 = vmatprep.subr.mxu0 0.0
    %213 = vmatpush1.msra.mxu0 0.0
    %214 = vmatprep.subr.mxu0 0.0
    %215 = vmatpush1.msra.mxu0 0.0
    %216 = vmatprep.mubr.f32.mxu0 0.0
    %v217 = vand.u32 %v20, 4294901760
    %218 = vmatmul.mubr.f32.gmra.mrb[0].mxu0 %v217
    %v219 = vpop.f32.mrb[0].mxu0
    %v220 = vadd.f32 %v109, %v219
    %v221 = vpop.f32.mrb[0].mxu0
    %222 = vmatprep.mubr.f32.mxu0 0.0
    %v223 = vand.u32 %v23, 4294901760
    %224 = vmatmul.mubr.f32.gmra.mrb[0].mxu0 %v223
    %v225 = vpop.f32.mrb[0].mxu0
    %v226 = vadd.f32 %v119, %v225
    %v227 = vpop.f32.mrb[0].mxu0
    %228 = vmatprep.mubr.f32.mxu0 0.0
    %v229 = vand.u32 %v26, 4294901760
    %230 = vmatmul.mubr.f32.gmra.mrb[0].mxu0 %v229
    %v231 = vpop.f32.mrb[0].mxu0
    %v232 = vadd.f32 %v129, %v231
    %v233 = vpop.f32.mrb[0].mxu0
    %234 = vmatprep.mubr.f32.mxu0 0.0
    %v235 = vand.u32 %v29, 4294901760
    %236 = vmatmul.mubr.f32.gmra.mrb[0].mxu0 %v235
    %v237 = vpop.f32.mrb[0].mxu0
    %v238 = vadd.f32 %v139, %v237
    %v239 = vpop.f32.mrb[0].mxu0
    %240 = vdwg.mxu0
    %241 = vmatprep.subr.mxu0 0.0
    %v242 = vand.u32 %v16, 4294901760
    %v243 = vsub.f32 %v16, %v242
    %244 = vmatpush1.msra.mxu0 %v243
    %245 = vmatprep.subr.mxu0 0.0
    %v246 = vand.u32 %v33, 4294901760
    %v247 = vsub.f32 %v33, %v246
    %248 = vmatpush1.msra.mxu0 %v247
    %249 = vmatprep.subr.mxu0 0.0
    %250 = vmatpush1.msra.mxu0 0.0
    %251 = vmatprep.subr.mxu0 0.0
    %252 = vmatpush1.msra.mxu0 0.0
    %253 = vmatprep.subr.mxu0 0.0
    %254 = vmatpush1.msra.mxu0 0.0
    %255 = vmatprep.subr.mxu0 0.0
    %256 = vmatpush1.msra.mxu0 0.0
    %257 = vmatprep.subr.mxu0 0.0
    %258 = vmatpush1.msra.mxu0 0.0
    %259 = vmatprep.subr.mxu0 0.0
    %260 = vmatpush1.msra.mxu0 0.0
    %261 = vmatprep.subr.mxu0 0.0
    %262 = vmatpush1.msra.mxu0 0.0
    %263 = vmatprep.subr.mxu0 0.0
    %264 = vmatpush1.msra.mxu0 0.0
    %265 = vmatprep.subr.mxu0 0.0
    %266 = vmatpush1.msra.mxu0 0.0
    %267 = vmatprep.subr.mxu0 0.0
    %268 = vmatpush1.msra.mxu0 0.0
    %269 = vmatprep.subr.mxu0 0.0
    %270 = vmatpush1.msra.mxu0 0.0
    %271 = vmatprep.subr.mxu0 0.0
    %272 = vmatpush1.msra.mxu0 0.0
    %273 = vmatprep.subr.mxu0 0.0
    %274 = vmatpush1.msra.mxu0 0.0
    %275 = vmatprep.subr.mxu0 0.0
    %276 = vmatpush1.msra.mxu0 0.0
    %277 = vmatprep.subr.mxu0 0.0
    %278 = vmatpush1.msra.mxu0 0.0
    %279 = vmatprep.subr.mxu0 0.0
    %280 = vmatpush1.msra.mxu0 0.0
    %281 = vmatprep.subr.mxu0 0.0
    %282 = vmatpush1.msra.mxu0 0.0
    %283 = vmatprep.subr.mxu0 0.0
    %284 = vmatpush1.msra.mxu0 0.0
    %285 = vmatprep.subr.mxu0 0.0
    %286 = vmatpush1.msra.mxu0 0.0
    %287 = vmatprep.subr.mxu0 0.0
    %288 = vmatpush1.msra.mxu0 0.0
    %289 = vmatprep.subr.mxu0 0.0
    %290 = vmatpush1.msra.mxu0 0.0
    %291 = vmatprep.subr.mxu0 0.0
    %292 = vmatpush1.msra.mxu0 0.0
    %293 = vmatprep.subr.mxu0 0.0
    %294 = vmatpush1.msra.mxu0 0.0
    %295 = vmatprep.subr.mxu0 0.0
    %296 = vmatpush1.msra.mxu0 0.0
    %297 = vmatprep.subr.mxu0 0.0
    %298 = vmatpush1.msra.mxu0 0.0
    %299 = vmatprep.subr.mxu0 0.0
    %300 = vmatpush1.msra.mxu0 0.0
    %301 = vmatprep.subr.mxu0 0.0
    %302 = vmatpush1.msra.mxu0 0.0
    %303 = vmatprep.subr.mxu0 0.0
    %304 = vmatpush1.msra.mxu0 0.0
    %305 = vmatprep.subr.mxu0 0.0
    %306 = vmatpush1.msra.mxu0 0.0
    %307 = vmatprep.subr.mxu0 0.0
    %308 = vmatpush1.msra.mxu0 0.0
    %309 = vmatprep.mubr.f32.mxu0 0.0
    %v310 = vand.u32 %v20, 4294901760
    %v311 = vsub.f32 %v20, %v310
    %312 = vmatmul.mubr.f32.gmra.mrb[0].mxu0 %v311
    %v313 = vpop.f32.mrb[0].mxu0
    %v314 = vadd.f32 %v220, %v313
    %v315 = vpop.f32.mrb[0].mxu0
    %316 = vmatprep.mubr.f32.mxu0 0.0
    %v317 = vand.u32 %v23, 4294901760
    %v318 = vsub.f32 %v23, %v317
    %319 = vmatmul.mubr.f32.gmra.mrb[0].mxu0 %v318
    %v320 = vpop.f32.mrb[0].mxu0
    %v321 = vadd.f32 %v226, %v320
    %v322 = vpop.f32.mrb[0].mxu0
    %323 = vmatprep.mubr.f32.mxu0 0.0
    %v324 = vand.u32 %v26, 4294901760
    %v325 = vsub.f32 %v26, %v324
    %326 = vmatmul.mubr.f32.gmra.mrb[0].mxu0 %v325
    %v327 = vpop.f32.mrb[0].mxu0
    %v328 = vadd.f32 %v232, %v327
    %v329 = vpop.f32.mrb[0].mxu0
    %330 = vmatprep.mubr.f32.mxu0 0.0
    %v331 = vand.u32 %v29, 4294901760
    %v332 = vsub.f32 %v29, %v331
    %333 = vmatmul.mubr.f32.gmra.mrb[0].mxu0 %v332
    %v334 = vpop.f32.mrb[0].mxu0
    %v335 = vadd.f32 %v238, %v334
    %v336 = vpop.f32.mrb[0].mxu0
    %337 = vdwg.mxu0
    %338 = vmatprep.subr.mxu0 0.0
    %v339 = vand.u32 %v16, 4294901760
    %340 = vmatpush1.msra.mxu0 %v339
    %341 = vmatprep.subr.mxu0 0.0
    %v342 = vand.u32 %v33, 4294901760
    %343 = vmatpush1.msra.mxu0 %v342
    %344 = vmatprep.subr.mxu0 0.0
    %345 = vmatpush1.msra.mxu0 0.0
    %346 = vmatprep.subr.mxu0 0.0
    %347 = vmatpush1.msra.mxu0 0.0
    %348 = vmatprep.subr.mxu0 0.0
    %349 = vmatpush1.msra.mxu0 0.0
    %350 = vmatprep.subr.mxu0 0.0
    %351 = vmatpush1.msra.mxu0 0.0
    %352 = vmatprep.subr.mxu0 0.0
    %353 = vmatpush1.msra.mxu0 0.0
    %354 = vmatprep.subr.mxu0 0.0
    %355 = vmatpush1.msra.mxu0 0.0
    %356 = vmatprep.subr.mxu0 0.0
    %357 = vmatpush1.msra.mxu0 0.0
    %358 = vmatprep.subr.mxu0 0.0
    %359 = vmatpush1.msra.mxu0 0.0
    %360 = vmatprep.subr.mxu0 0.0
    %361 = vmatpush1.msra.mxu0 0.0
    %362 = vmatprep.subr.mxu0 0.0
    %363 = vmatpush1.msra.mxu0 0.0
    %364 = vmatprep.subr.mxu0 0.0
    %365 = vmatpush1.msra.mxu0 0.0
    %366 = vmatprep.subr.mxu0 0.0
    %367 = vmatpush1.msra.mxu0 0.0
    %368 = vmatprep.subr.mxu0 0.0
    %369 = vmatpush1.msra.mxu0 0.0
    %370 = vmatprep.subr.mxu0 0.0
    %371 = vmatpush1.msra.mxu0 0.0
    %372 = vmatprep.subr.mxu0 0.0
    %373 = vmatpush1.msra.mxu0 0.0
    %374 = vmatprep.subr.mxu0 0.0
    %375 = vmatpush1.msra.mxu0 0.0
    %376 = vmatprep.subr.mxu0 0.0
    %377 = vmatpush1.msra.mxu0 0.0
    %378 = vmatprep.subr.mxu0 0.0
    %379 = vmatpush1.msra.mxu0 0.0
    %380 = vmatprep.subr.mxu0 0.0
    %381 = vmatpush1.msra.mxu0 0.0
    %382 = vmatprep.subr.mxu0 0.0
    %383 = vmatpush1.msra.mxu0 0.0
    %384 = vmatprep.subr.mxu0 0.0
    %385 = vmatpush1.msra.mxu0 0.0
    %386 = vmatprep.subr.mxu0 0.0
    %387 = vmatpush1.msra.mxu0 0.0
    %388 = vmatprep.subr.mxu0 0.0
    %389 = vmatpush1.msra.mxu0 0.0
    %390 = vmatprep.subr.mxu0 0.0
    %391 = vmatpush1.msra.mxu0 0.0
    %392 = vmatprep.subr.mxu0 0.0
    %393 = vmatpush1.msra.mxu0 0.0
    %394 = vmatprep.subr.mxu0 0.0
    %395 = vmatpush1.msra.mxu0 0.0
    %396 = vmatprep.subr.mxu0 0.0
    %397 = vmatpush1.msra.mxu0 0.0
    %398 = vmatprep.subr.mxu0 0.0
    %399 = vmatpush1.msra.mxu0 0.0
    %400 = vmatprep.subr.mxu0 0.0
    %401 = vmatpush1.msra.mxu0 0.0
    %402 = vmatprep.subr.mxu0 0.0
    %403 = vmatpush1.msra.mxu0 0.0
    %404 = vmatprep.mubr.f32.mxu0 0.0
    %v405 = vand.u32 %v20, 4294901760
    %v406 = vsub.f32 %v20, %v405
    %v407 = vand.u32 %v406, 4294901760
    %408 = vmatmul.mubr.f32.gmra.mrb[0].mxu0 %v407
    %v409 = vpop.f32.mrb[0].mxu0
    %v410 = vadd.f32 %v314, %v409
    %v411 = vpop.f32.mrb[0].mxu0
    %412 = vmatprep.mubr.f32.mxu0 0.0
    %v413 = vand.u32 %v23, 4294901760
    %v414 = vsub.f32 %v23, %v413
    %v415 = vand.u32 %v414, 4294901760
    %416 = vmatmul.mubr.f32.gmra.mrb[0].mxu0 %v415
    %v417 = vpop.f32.mrb[0].mxu0
    %v418 = vadd.f32 %v321, %v417
    %v419 = vpop.f32.mrb[0].mxu0
    %420 = vmatprep.mubr.f32.mxu0 0.0
    %v421 = vand.u32 %v26, 4294901760
    %v422 = vsub.f32 %v26, %v421
    %v423 = vand.u32 %v422, 4294901760
    %424 = vmatmul.mubr.f32.gmra.mrb[0].mxu0 %v423
    %v425 = vpop.f32.mrb[0].mxu0
    %v426 = vadd.f32 %v328, %v425
    %v427 = vpop.f32.mrb[0].mxu0
    %428 = vmatprep.mubr.f32.mxu0 0.0
    %v429 = vand.u32 %v29, 4294901760
    %v430 = vsub.f32 %v29, %v429
    %v431 = vand.u32 %v430, 4294901760
    %432 = vmatmul.mubr.f32.gmra.mrb[0].mxu0 %v431
    %v433 = vpop.f32.mrb[0].mxu0
    %v434 = vadd.f32 %v335, %v433
    %v435 = vpop.f32.mrb[0].mxu0
    %436 = vdwg.mxu0
    %437 = vmatprep.subr.mxu0 0.0
    %v438 = vand.u32 %v16, 4294901760
    %v439 = vsub.f32 %v16, %v438
    %v440 = vand.u32 %v439, 4294901760
    %441 = vmatpush1.msra.mxu0 %v440
    %442 = vmatprep.subr.mxu0 0.0
    %v443 = vand.u32 %v33, 4294901760
    %v444 = vsub.f32 %v33, %v443
    %v445 = vand.u32 %v444, 4294901760
    %446 = vmatpush1.msra.mxu0 %v445
    %447 = vmatprep.subr.mxu0 0.0
    %448 = vmatpush1.msra.mxu0 0.0
    %449 = vmatprep.subr.mxu0 0.0
    %450 = vmatpush1.msra.mxu0 0.0
    %451 = vmatprep.subr.mxu0 0.0
    %452 = vmatpush1.msra.mxu0 0.0
    %453 = vmatprep.subr.mxu0 0.0
    %454 = vmatpush1.msra.mxu0 0.0
    %455 = vmatprep.subr.mxu0 0.0
    %456 = vmatpush1.msra.mxu0 0.0
    %457 = vmatprep.subr.mxu0 0.0
    %458 = vmatpush1.msra.mxu0 0.0
    %459 = vmatprep.subr.mxu0 0.0
    %460 = vmatpush1.msra.mxu0 0.0
    %461 = vmatprep.subr.mxu0 0.0
    %462 = vmatpush1.msra.mxu0 0.0
    %463 = vmatprep.subr.mxu0 0.0
    %464 = vmatpush1.msra.mxu0 0.0
    %465 = vmatprep.subr.mxu0 0.0
    %466 = vmatpush1.msra.mxu0 0.0
    %467 = vmatprep.subr.mxu0 0.0
    %468 = vmatpush1.msra.mxu0 0.0
    %469 = vmatprep.subr.mxu0 0.0
    %470 = vmatpush1.msra.mxu0 0.0
    %471 = vmatprep.subr.mxu0 0.0
    %472 = vmatpush1.msra.mxu0 0.0
    %473 = vmatprep.subr.mxu0 0.0
    %474 = vmatpush1.msra.mxu0 0.0
    %475 = vmatprep.subr.mxu0 0.0
    %476 = vmatpush1.msra.mxu0 0.0
    %477 = vmatprep.subr.mxu0 0.0
    %478 = vmatpush1.msra.mxu0 0.0
    %479 = vmatprep.subr.mxu0 0.0
    %480 = vmatpush1.msra.mxu0 0.0
    %481 = vmatprep.subr.mxu0 0.0
    %482 = vmatpush1.msra.mxu0 0.0
    %483 = vmatprep.subr.mxu0 0.0
    %484 = vmatpush1.msra.mxu0 0.0
    %485 = vmatprep.subr.mxu0 0.0
    %486 = vmatpush1.msra.mxu0 0.0
    %487 = vmatprep.subr.mxu0 0.0
    %488 = vmatpush1.msra.mxu0 0.0
    %489 = vmatprep.subr.mxu0 0.0
    %490 = vmatpush1.msra.mxu0 0.0
    %491 = vmatprep.subr.mxu0 0.0
    %492 = vmatpush1.msra.mxu0 0.0
    %493 = vmatprep.subr.mxu0 0.0
    %494 = vmatpush1.msra.mxu0 0.0
    %495 = vmatprep.subr.mxu0 0.0
    %496 = vmatpush1.msra.mxu0 0.0
    %497 = vmatprep.subr.mxu0 0.0
    %498 = vmatpush1.msra.mxu0 0.0
    %499 = vmatprep.subr.mxu0 0.0
    %500 = vmatpush1.msra.mxu0 0.0
    %501 = vmatprep.subr.mxu0 0.0
    %502 = vmatpush1.msra.mxu0 0.0
    %503 = vmatprep.subr.mxu0 0.0
    %504 = vmatpush1.msra.mxu0 0.0
    %505 = vmatprep.subr.mxu0 0.0
    %506 = vmatpush1.msra.mxu0 0.0
    %507 = vmatprep.mubr.f32.mxu0 0.0
    %v508 = vand.u32 %v20, 4294901760
    %509 = vmatmul.mubr.f32.gmra.mrb[0].mxu0 %v508
    %v510 = vpop.f32.mrb[0].mxu0
    %v511 = vadd.f32 %v410, %v510
    %v512 = vpop.f32.mrb[0].mxu0
    %513 = vmatprep.mubr.f32.mxu0 0.0
    %v514 = vand.u32 %v23, 4294901760
    %515 = vmatmul.mubr.f32.gmra.mrb[0].mxu0 %v514
    %v516 = vpop.f32.mrb[0].mxu0
    %v517 = vadd.f32 %v418, %v516
    %v518 = vpop.f32.mrb[0].mxu0
    %519 = vmatprep.mubr.f32.mxu0 0.0
    %v520 = vand.u32 %v26, 4294901760
    %521 = vmatmul.mubr.f32.gmra.mrb[0].mxu0 %v520
    %v522 = vpop.f32.mrb[0].mxu0
    %v523 = vadd.f32 %v426, %v522
    %v524 = vpop.f32.mrb[0].mxu0
    %525 = vmatprep.mubr.f32.mxu0 0.0
    %v526 = vand.u32 %v29, 4294901760
    %527 = vmatmul.mubr.f32.gmra.mrb[0].mxu0 %v526
    %v528 = vpop.f32.mrb[0].mxu0
    %v529 = vadd.f32 %v434, %v528
    %v530 = vpop.f32.mrb[0].mxu0
    %531 = vdwg.mxu0
    %532 = vmatprep.subr.mxu0 0.0
    %v533 = vand.u32 %v16, 4294901760
    %534 = vmatpush1.msra.mxu0 %v533
    %535 = vmatprep.subr.mxu0 0.0
    %v536 = vand.u32 %v33, 4294901760
    %537 = vmatpush1.msra.mxu0 %v536
    %538 = vmatprep.subr.mxu0 0.0
    %539 = vmatpush1.msra.mxu0 0.0
    %540 = vmatprep.subr.mxu0 0.0
    %541 = vmatpush1.msra.mxu0 0.0
    %542 = vmatprep.subr.mxu0 0.0
    %543 = vmatpush1.msra.mxu0 0.0
    %544 = vmatprep.subr.mxu0 0.0
    %545 = vmatpush1.msra.mxu0 0.0
    %546 = vmatprep.subr.mxu0 0.0
    %547 = vmatpush1.msra.mxu0 0.0
    %548 = vmatprep.subr.mxu0 0.0
    %549 = vmatpush1.msra.mxu0 0.0
    %550 = vmatprep.subr.mxu0 0.0
    %551 = vmatpush1.msra.mxu0 0.0
    %552 = vmatprep.subr.mxu0 0.0
    %553 = vmatpush1.msra.mxu0 0.0
    %554 = vmatprep.subr.mxu0 0.0
    %555 = vmatpush1.msra.mxu0 0.0
    %556 = vmatprep.subr.mxu0 0.0
    %557 = vmatpush1.msra.mxu0 0.0
    %558 = vmatprep.subr.mxu0 0.0
    %559 = vmatpush1.msra.mxu0 0.0
    %560 = vmatprep.subr.mxu0 0.0
    %561 = vmatpush1.msra.mxu0 0.0
    %562 = vmatprep.subr.mxu0 0.0
    %563 = vmatpush1.msra.mxu0 0.0
    %564 = vmatprep.subr.mxu0 0.0
    %565 = vmatpush1.msra.mxu0 0.0
    %566 = vmatprep.subr.mxu0 0.0
    %567 = vmatpush1.msra.mxu0 0.0
    %568 = vmatprep.subr.mxu0 0.0
    %569 = vmatpush1.msra.mxu0 0.0
    %570 = vmatprep.subr.mxu0 0.0
    %571 = vmatpush1.msra.mxu0 0.0
    %572 = vmatprep.subr.mxu0 0.0
    %573 = vmatpush1.msra.mxu0 0.0
    %574 = vmatprep.subr.mxu0 0.0
    %575 = vmatpush1.msra.mxu0 0.0
    %576 = vmatprep.subr.mxu0 0.0
    %577 = vmatpush1.msra.mxu0 0.0
    %578 = vmatprep.subr.mxu0 0.0
    %579 = vmatpush1.msra.mxu0 0.0
    %580 = vmatprep.subr.mxu0 0.0
    %581 = vmatpush1.msra.mxu0 0.0
    %582 = vmatprep.subr.mxu0 0.0
    %583 = vmatpush1.msra.mxu0 0.0
    %584 = vmatprep.subr.mxu0 0.0
    %585 = vmatpush1.msra.mxu0 0.0
    %586 = vmatprep.subr.mxu0 0.0
    %587 = vmatpush1.msra.mxu0 0.0
    %588 = vmatprep.subr.mxu0 0.0
    %589 = vmatpush1.msra.mxu0 0.0
    %590 = vmatprep.subr.mxu0 0.0
    %591 = vmatpush1.msra.mxu0 0.0
    %592 = vmatprep.subr.mxu0 0.0
    %593 = vmatpush1.msra.mxu0 0.0
    %594 = vmatprep.subr.mxu0 0.0
    %595 = vmatpush1.msra.mxu0 0.0
    %596 = vmatprep.subr.mxu0 0.0
    %597 = vmatpush1.msra.mxu0 0.0
    %598 = vmatprep.mubr.f32.mxu0 0.0
    %v599 = vand.u32 %v20, 4294901760
    %600 = vmatmul.mubr.f32.gmra.mrb[0].mxu0 %v599
    %v601 = vpop.f32.mrb[0].mxu0
    %v602 = vadd.f32 %v511, %v601
    %v603 = vpop.f32.mrb[0].mxu0
    %604 = vmatprep.mubr.f32.mxu0 0.0
    %v605 = vand.u32 %v23, 4294901760
    %606 = vmatmul.mubr.f32.gmra.mrb[0].mxu0 %v605
    %v607 = vpop.f32.mrb[0].mxu0
    %v608 = vadd.f32 %v517, %v607
    %v609 = vpop.f32.mrb[0].mxu0
    %610 = vmatprep.mubr.f32.mxu0 0.0
    %v611 = vand.u32 %v26, 4294901760
    %612 = vmatmul.mubr.f32.gmra.mrb[0].mxu0 %v611
    %v613 = vpop.f32.mrb[0].mxu0
    %v614 = vadd.f32 %v523, %v613
    %v615 = vpop.f32.mrb[0].mxu0
    %616 = vmatprep.mubr.f32.mxu0 0.0
    %v617 = vand.u32 %v29, 4294901760
    %618 = vmatmul.mubr.f32.gmra.mrb[0].mxu0 %v617
    %v619 = vpop.f32.mrb[0].mxu0
    %v620 = vadd.f32 %v529, %v619
    %v621 = vpop.f32.mrb[0].mxu0
    %622 = vdwg.mxu0
    %623 = vst [vmem:[#allocation2] sm:$0xff] %v602
    %624 = vst [vmem:[#allocation2 + $0x8] sm:$0xff] %v608
    %625 = vst [vmem:[#allocation2 + $0x10] sm:$0xff] %v614
    %626 = vst [vmem:[#allocation2 + $0x18] sm:$0xff] %v620
    // Predicated region
    $region10: #{tpu_custom_call.1} parent=1 // pred_check
      _
    $region11: #{tpu_custom_call.1} parent=1 // pred_check_branch
      %628 = sbr.rel (0) target = $region13
    $region12: #{tpu_custom_call.1} parent=1 // pred_region
      %s630 = ssub.s32 512, 512
      %631 = vsyncadd [#allocation3], %s630
      %s632 = sshll.u32 [#allocation2], 4
      %s633 = int_to_ptr.vmem [resolvable:$true] %s632
      %638 = dma.vmem_to_hbm [thread:$0]  %s633, 512, %s2, [#allocation3], 128, 128, 8
    $region13: #{tpu_custom_call.1} parent=1 // pred_fallthru
      _
    // Predicated region
    $region14: #{tpu_custom_call.1} parent=1 // pred_check
      _
    $region15: #{tpu_custom_call.1} parent=1 // pred_check_branch
      %640 = sbr.rel (0) target = $region17
    $region16: #{tpu_custom_call.1} parent=1 // pred_region
      %641 = dma.done [#allocation3], 512
    $region17: #{tpu_custom_call.1} parent=1 // pred_fallthru
      _
    %642 = vsyncpa [#allocation3], 1

</llo_original>
